<compile_context>
chip_gen: v6e
topology: v6e:2x2x1
jax: 0.10.0
libtpu: 0.0.40
codegen_flags: <defaults>
</compile_context>

<pallas_src>
import jax
import jax.numpy as jnp
from jax.experimental import pallas as pl
from jax.experimental.pallas import tpu as pltpu

LOSS_WEIGHT = 1.0          # DIoULoss(loss_weight=1.0)
_BEV_COLS = [0, 1, 3, 4, 6]  # x, y, dx, dy, yaw -- the only features used
_UNION_EPS = 1e-6            # mmdet bbox_overlaps eps (guards 0-area boxes)


def _diou_kernel(b_ref, q_ref, w_ref, o_ref):
    # b_ref, q_ref: (5, TR, TC) planar [x, y, dx, dy, yaw]; w_ref/o_ref: (TR, TC).
    bx, by, bdx, bdy, brot = (b_ref[i] for i in range(5))
    qx, qy, qdx, qdy, qrot = (q_ref[i] for i in range(5))

    # BEV axis-aligned corner boxes (pred / target), as in the torch.cat.
    px1 = bx - bdx * 0.5
    py1 = by - bdy * 0.5
    px2 = bx + bdx * 0.5
    py2 = by + bdy * 0.5
    tx1 = qx - qdx * 0.5
    ty1 = qy - qdy * 0.5
    tx2 = qx + qdx * 0.5
    ty2 = qy + qdy * 0.5

    # aligned IoU (bbox_overlaps(pred, target, is_aligned=True))
    ow = jnp.maximum(jnp.minimum(px2, tx2) - jnp.maximum(px1, tx1), 0.0)
    oh = jnp.maximum(jnp.minimum(py2, ty2) - jnp.maximum(py1, ty1), 0.0)
    overlap = ow * oh
    area1 = (px2 - px1) * (py2 - py1)
    area2 = (tx2 - tx1) * (ty2 - ty1)
    union = jnp.maximum(area1 + area2 - overlap, _UNION_EPS)
    ious = (overlap / union) * jnp.cos(brot - qrot)

    # enclosing-box diagonal (min/max over all 4 x coords and all 4 y coords)
    x_min = jnp.minimum(jnp.minimum(px1, px2), jnp.minimum(tx1, tx2))
    x_max = jnp.maximum(jnp.maximum(px1, px2), jnp.maximum(tx1, tx2))
    y_min = jnp.minimum(jnp.minimum(py1, py2), jnp.minimum(ty1, ty2))
    y_max = jnp.maximum(jnp.maximum(py1, py2), jnp.maximum(ty1, ty2))
    dist_max = (x_max - x_min) ** 2 + (y_max - y_min) ** 2

    # center distance
    center = (bx - qx) ** 2 + (by - qy) ** 2

    loss = w_ref[...] * (1.0 - ious + (center + 1e-10) / (dist_max + 1e-10))
    o_ref[...] = (LOSS_WEIGHT * loss).astype(o_ref.dtype)


def _choose_tiling(M, itemsize):
    """Pick (TC lanes, TR sublane-rows, padded row count) for flattened size M."""
    sub = {4: 8, 2: 16, 1: 32}.get(itemsize, 8)    # min sublane tile per dtype
    TC = 512 if M >= 8 * 512 else 128              # lane width (multiple of 128)
    Mr = -(-M // TC)                               # rows before sublane padding
    # ~256K elems (~12 MiB traffic at 48 B/elem) per step; ~24 MiB double-buffered
    # VMEM, safe on v7x (64 MiB/TC) and amortizes the ~0.35 us/step grid overhead.
    target_rows = max(sub, (262144 // TC) // sub * sub)
    TR = min(target_rows, ((Mr + sub - 1) // sub) * sub)  # no over-padding
    Mr_pad = ((Mr + TR - 1) // TR) * TR
    return TC, TR, Mr_pad


@jax.jit
def diou_loss(boxes, qboxes, weights):
    """boxes, qboxes: (B, N, 7); weights: (B, N).  Returns (B, N) loss."""
    assert boxes.shape == qboxes.shape
    B, N = boxes.shape[0], boxes.shape[1]
    M = B * N
    dtype = boxes.dtype

    TC, TR, Mr_pad = _choose_tiling(M, jnp.dtype(dtype).itemsize)
    M_pad = Mr_pad * TC
    grid = (Mr_pad // TR,)

    # Gather only the 5 used features, then go planar (feature-major).  Under
    # jit the gather + transpose + pad fuse into a single layout pass whose
    # write volume is 5/7 of the old full-7-feature transpose.
    b5 = boxes.reshape(M, 7)[:, _BEV_COLS].T       # (5, M)
    q5 = qboxes.reshape(M, 7)[:, _BEV_COLS].T      # (5, M)
    w = weights.reshape(M)

    pad = M_pad - M
    if pad:
        # Plain zero pad: the union/eps guards in the kernel keep the pad tail
        # finite, its weight is 0, and it is sliced off after the kernel.
        b5 = jnp.pad(b5, ((0, 0), (0, pad)))
        q5 = jnp.pad(q5, ((0, 0), (0, pad)))
        w = jnp.pad(w, (0, pad))

    b_pl = b5.reshape(5, Mr_pad, TC)
    q_pl = q5.reshape(5, Mr_pad, TC)
    w_pl = w.reshape(Mr_pad, TC)

    out = pl.pallas_call(
        _diou_kernel,
        out_shape=jax.ShapeDtypeStruct((Mr_pad, TC), dtype),
        grid_spec=pltpu.PrefetchScalarGridSpec(
            num_scalar_prefetch=0,
            grid=grid,
            in_specs=[
                pl.BlockSpec((5, TR, TC), lambda i: (0, i, 0)),
                pl.BlockSpec((5, TR, TC), lambda i: (0, i, 0)),
                pl.BlockSpec((TR, TC), lambda i: (i, 0)),
            ],
            out_specs=pl.BlockSpec((TR, TC), lambda i: (i, 0)),
        ),
        compiler_params=pltpu.CompilerParams(
            dimension_semantics=("parallel",),   # megacore sharding on v7x
            vmem_limit_bytes=40 * 1024 * 1024,   # > v5e's 16 MiB default, < v7x 64 MiB
        ),
        cost_estimate=pl.CostEstimate(
            flops=40 * M_pad,
            transcendentals=M_pad,               # one cos per element
            bytes_accessed=48 * M_pad,           # 10 input planes + w + out, f32
        ),
    )(b_pl, q_pl, w_pl)

    return out.reshape(-1)[:M].reshape(B, N)


def _diou_loss_ref(boxes, qboxes, weights):
    """Pure-JAX reference mirroring the PyTorch forward (with mmdet's union eps)."""
    B = boxes.shape[0]
    b = boxes.reshape(-1, 7)
    q = qboxes.reshape(-1, 7)
    w = weights.reshape(-1)
    pred = jnp.stack(
        [b[:, 0] - b[:, 3] / 2, b[:, 1] - b[:, 4] / 2,
         b[:, 0] + b[:, 3] / 2, b[:, 1] + b[:, 4] / 2], axis=1)
    tgt = jnp.stack(
        [q[:, 0] - q[:, 3] / 2, q[:, 1] - q[:, 4] / 2,
         q[:, 0] + q[:, 3] / 2, q[:, 1] + q[:, 4] / 2], axis=1)
    lt = jnp.maximum(pred[:, :2], tgt[:, :2])
    rb = jnp.minimum(pred[:, 2:], tgt[:, 2:])
    wh = jnp.maximum(rb - lt, 0.0)
    overlap = wh[:, 0] * wh[:, 1]
    a1 = (pred[:, 2] - pred[:, 0]) * (pred[:, 3] - pred[:, 1])
    a2 = (tgt[:, 2] - tgt[:, 0]) * (tgt[:, 3] - tgt[:, 1])
    union = jnp.maximum(a1 + a2 - overlap, _UNION_EPS)
    ious = (overlap / union) * jnp.cos(b[:, 6] - q[:, 6])
    x_all = jnp.stack([pred[:, 0], pred[:, 2], tgt[:, 0], tgt[:, 2]], axis=1)
    y_all = jnp.stack([pred[:, 1], pred[:, 3], tgt[:, 1], tgt[:, 3]], axis=1)
    dist_max = (x_all.max(1) - x_all.min(1)) ** 2 + (y_all.max(1) - y_all.min(1)) ** 2
    center = (b[:, 0] - q[:, 0]) ** 2 + (b[:, 1] - q[:, 1]) ** 2
    loss = w * (1.0 - ious + (center + 1e-10) / (dist_max + 1e-10))
    return LOSS_WEIGHT * loss.reshape(B, -1)


if __name__ == "__main__":
    key = jax.random.PRNGKey(0)
    B, N = 2, 67  # M = 134 -> exercises the pad-to-tile + slice-back path
    k1, k2, k3, k4, k5 = jax.random.split(key, 5)

    # boxes: (x, y, z, dx, dy, dz, yaw) — positive sizes, arbitrary centers/yaw
    centers = jax.random.normal(k1, (B, N, 3), jnp.float32) * 5.0
    sizes = jax.random.uniform(k2, (B, N, 3), jnp.float32, 0.5, 3.0)
    yaw = jax.random.uniform(k3, (B, N, 1), jnp.float32, -3.14, 3.14)
    boxes = jnp.concatenate([centers, sizes, yaw], axis=-1)

    qcenters = centers + jax.random.normal(k4, (B, N, 3), jnp.float32) * 0.3
    qsizes = sizes * jax.random.uniform(k5, (B, N, 3), jnp.float32, 0.8, 1.2)
    qyaw = yaw + 0.1
    qboxes = jnp.concatenate([qcenters, qsizes, qyaw], axis=-1)

    weights = jnp.ones((B, N), jnp.float32)

    out = jax.block_until_ready(diou_loss(boxes, qboxes, weights))
    ref = _diou_loss_ref(boxes, qboxes, weights)

    assert out.shape == (B, N)
    assert bool(jnp.all(jnp.isfinite(out))), "non-finite loss values"
    assert jnp.allclose(out, ref, rtol=1e-5, atol=1e-5), "mismatch vs reference"
    print("KERNEL_OK")
</pallas_src>

<mosaic_0001>
module attributes {stable_mosaic.version = 11 : i64} {
  func.func @_diou_kernel(%arg0: i32, %arg1: memref<5x8x128xf32, #tpu.memory_space<vmem>>, %arg2: memref<5x8x128xf32, #tpu.memory_space<vmem>>, %arg3: memref<8x128xf32, #tpu.memory_space<vmem>>, %arg4: memref<8x128xf32, #tpu.memory_space<vmem>>) attributes {dimension_semantics = [#tpu.dimension_semantics<parallel>], iteration_bounds = array<i64: 1>, scalar_prefetch = 0 : i64, scratch_operands = 0 : i64, tpu.core_type = #tpu.core_type<tc>, window_params = [{transform_indices = @transform_0, window_bounds = array<i64: 5, 8, 128>}, {transform_indices = @transform_1, window_bounds = array<i64: 5, 8, 128>}, {transform_indices = @transform_2, window_bounds = array<i64: 8, 128>}, {transform_indices = @transform_3, window_bounds = array<i64: 8, 128>}]} {
    %c0 = arith.constant 0 : index
    %c0_0 = arith.constant 0 : index
    %c0_1 = arith.constant 0 : index
    %0 = vector.load %arg1[%c0, %c0_0, %c0_1] : memref<5x8x128xf32, #tpu.memory_space<vmem>>, vector<1x8x128xf32>
    %1 = vector.shape_cast %0 : vector<1x8x128xf32> to vector<8x128xf32>
    %c1 = arith.constant 1 : index
    %c0_2 = arith.constant 0 : index
    %c0_3 = arith.constant 0 : index
    %2 = vector.load %arg1[%c1, %c0_2, %c0_3] : memref<5x8x128xf32, #tpu.memory_space<vmem>>, vector<1x8x128xf32>
    %3 = vector.shape_cast %2 : vector<1x8x128xf32> to vector<8x128xf32>
    %c2 = arith.constant 2 : index
    %c0_4 = arith.constant 0 : index
    %c0_5 = arith.constant 0 : index
    %4 = vector.load %arg1[%c2, %c0_4, %c0_5] : memref<5x8x128xf32, #tpu.memory_space<vmem>>, vector<1x8x128xf32>
    %5 = vector.shape_cast %4 : vector<1x8x128xf32> to vector<8x128xf32>
    %c3 = arith.constant 3 : index
    %c0_6 = arith.constant 0 : index
    %c0_7 = arith.constant 0 : index
    %6 = vector.load %arg1[%c3, %c0_6, %c0_7] : memref<5x8x128xf32, #tpu.memory_space<vmem>>, vector<1x8x128xf32>
    %7 = vector.shape_cast %6 : vector<1x8x128xf32> to vector<8x128xf32>
    %c4 = arith.constant 4 : index
    %c0_8 = arith.constant 0 : index
    %c0_9 = arith.constant 0 : index
    %8 = vector.load %arg1[%c4, %c0_8, %c0_9] : memref<5x8x128xf32, #tpu.memory_space<vmem>>, vector<1x8x128xf32>
    %9 = vector.shape_cast %8 : vector<1x8x128xf32> to vector<8x128xf32>
    %c0_10 = arith.constant 0 : index
    %c0_11 = arith.constant 0 : index
    %c0_12 = arith.constant 0 : index
    %10 = vector.load %arg2[%c0_10, %c0_11, %c0_12] : memref<5x8x128xf32, #tpu.memory_space<vmem>>, vector<1x8x128xf32>
    %11 = vector.shape_cast %10 : vector<1x8x128xf32> to vector<8x128xf32>
    %c1_13 = arith.constant 1 : index
    %c0_14 = arith.constant 0 : index
    %c0_15 = arith.constant 0 : index
    %12 = vector.load %arg2[%c1_13, %c0_14, %c0_15] : memref<5x8x128xf32, #tpu.memory_space<vmem>>, vector<1x8x128xf32>
    %13 = vector.shape_cast %12 : vector<1x8x128xf32> to vector<8x128xf32>
    %c2_16 = arith.constant 2 : index
    %c0_17 = arith.constant 0 : index
    %c0_18 = arith.constant 0 : index
    %14 = vector.load %arg2[%c2_16, %c0_17, %c0_18] : memref<5x8x128xf32, #tpu.memory_space<vmem>>, vector<1x8x128xf32>
    %15 = vector.shape_cast %14 : vector<1x8x128xf32> to vector<8x128xf32>
    %c3_19 = arith.constant 3 : index
    %c0_20 = arith.constant 0 : index
    %c0_21 = arith.constant 0 : index
    %16 = vector.load %arg2[%c3_19, %c0_20, %c0_21] : memref<5x8x128xf32, #tpu.memory_space<vmem>>, vector<1x8x128xf32>
    %17 = vector.shape_cast %16 : vector<1x8x128xf32> to vector<8x128xf32>
    %c4_22 = arith.constant 4 : index
    %c0_23 = arith.constant 0 : index
    %c0_24 = arith.constant 0 : index
    %18 = vector.load %arg2[%c4_22, %c0_23, %c0_24] : memref<5x8x128xf32, #tpu.memory_space<vmem>>, vector<1x8x128xf32>
    %19 = vector.shape_cast %18 : vector<1x8x128xf32> to vector<8x128xf32>
    %cst = arith.constant 5.000000e-01 : f32
    %20 = vector.broadcast %cst : f32 to vector<8x128xf32>
    %21 = arith.mulf %5, %20 : vector<8x128xf32>
    %22 = arith.subf %1, %21 : vector<8x128xf32>
    %cst_25 = arith.constant 5.000000e-01 : f32
    %23 = vector.broadcast %cst_25 : f32 to vector<8x128xf32>
    %24 = arith.mulf %7, %23 : vector<8x128xf32>
    %25 = arith.subf %3, %24 : vector<8x128xf32>
    %cst_26 = arith.constant 5.000000e-01 : f32
    %26 = vector.broadcast %cst_26 : f32 to vector<8x128xf32>
    %27 = arith.mulf %5, %26 : vector<8x128xf32>
    %28 = arith.addf %1, %27 : vector<8x128xf32>
    %cst_27 = arith.constant 5.000000e-01 : f32
    %29 = vector.broadcast %cst_27 : f32 to vector<8x128xf32>
    %30 = arith.mulf %7, %29 : vector<8x128xf32>
    %31 = arith.addf %3, %30 : vector<8x128xf32>
    %cst_28 = arith.constant 5.000000e-01 : f32
    %32 = vector.broadcast %cst_28 : f32 to vector<8x128xf32>
    %33 = arith.mulf %15, %32 : vector<8x128xf32>
    %34 = arith.subf %11, %33 : vector<8x128xf32>
    %cst_29 = arith.constant 5.000000e-01 : f32
    %35 = vector.broadcast %cst_29 : f32 to vector<8x128xf32>
    %36 = arith.mulf %17, %35 : vector<8x128xf32>
    %37 = arith.subf %13, %36 : vector<8x128xf32>
    %cst_30 = arith.constant 5.000000e-01 : f32
    %38 = vector.broadcast %cst_30 : f32 to vector<8x128xf32>
    %39 = arith.mulf %15, %38 : vector<8x128xf32>
    %40 = arith.addf %11, %39 : vector<8x128xf32>
    %cst_31 = arith.constant 5.000000e-01 : f32
    %41 = vector.broadcast %cst_31 : f32 to vector<8x128xf32>
    %42 = arith.mulf %17, %41 : vector<8x128xf32>
    %43 = arith.addf %13, %42 : vector<8x128xf32>
    %44 = arith.minimumf %28, %40 : vector<8x128xf32>
    %45 = arith.maximumf %22, %34 : vector<8x128xf32>
    %46 = arith.subf %44, %45 : vector<8x128xf32>
    %cst_32 = arith.constant 0.000000e+00 : f32
    %47 = vector.broadcast %cst_32 : f32 to vector<8x128xf32>
    %48 = arith.maximumf %46, %47 : vector<8x128xf32>
    %49 = arith.minimumf %31, %43 : vector<8x128xf32>
    %50 = arith.maximumf %25, %37 : vector<8x128xf32>
    %51 = arith.subf %49, %50 : vector<8x128xf32>
    %cst_33 = arith.constant 0.000000e+00 : f32
    %52 = vector.broadcast %cst_33 : f32 to vector<8x128xf32>
    %53 = arith.maximumf %51, %52 : vector<8x128xf32>
    %54 = arith.mulf %48, %53 : vector<8x128xf32>
    %55 = arith.subf %28, %22 : vector<8x128xf32>
    %56 = arith.subf %31, %25 : vector<8x128xf32>
    %57 = arith.mulf %55, %56 : vector<8x128xf32>
    %58 = arith.subf %40, %34 : vector<8x128xf32>
    %59 = arith.subf %43, %37 : vector<8x128xf32>
    %60 = arith.mulf %58, %59 : vector<8x128xf32>
    %61 = arith.addf %57, %60 : vector<8x128xf32>
    %62 = arith.subf %61, %54 : vector<8x128xf32>
    %cst_34 = arith.constant 9.99999997E-7 : f32
    %63 = vector.broadcast %cst_34 : f32 to vector<8x128xf32>
    %64 = arith.maximumf %62, %63 : vector<8x128xf32>
    %65 = arith.divf %54, %64 : vector<8x128xf32>
    %66 = arith.subf %9, %19 : vector<8x128xf32>
    %67 = math.cos %66 : vector<8x128xf32>
    %68 = arith.mulf %65, %67 : vector<8x128xf32>
    %69 = arith.minimumf %22, %28 : vector<8x128xf32>
    %70 = arith.minimumf %34, %40 : vector<8x128xf32>
    %71 = arith.minimumf %69, %70 : vector<8x128xf32>
    %72 = arith.maximumf %22, %28 : vector<8x128xf32>
    %73 = arith.maximumf %34, %40 : vector<8x128xf32>
    %74 = arith.maximumf %72, %73 : vector<8x128xf32>
    %75 = arith.minimumf %25, %31 : vector<8x128xf32>
    %76 = arith.minimumf %37, %43 : vector<8x128xf32>
    %77 = arith.minimumf %75, %76 : vector<8x128xf32>
    %78 = arith.maximumf %25, %31 : vector<8x128xf32>
    %79 = arith.maximumf %37, %43 : vector<8x128xf32>
    %80 = arith.maximumf %78, %79 : vector<8x128xf32>
    %81 = arith.subf %74, %71 : vector<8x128xf32>
    %82 = arith.mulf %81, %81 : vector<8x128xf32>
    %83 = arith.subf %80, %77 : vector<8x128xf32>
    %84 = arith.mulf %83, %83 : vector<8x128xf32>
    %85 = arith.addf %82, %84 : vector<8x128xf32>
    %86 = arith.subf %1, %11 : vector<8x128xf32>
    %87 = arith.mulf %86, %86 : vector<8x128xf32>
    %88 = arith.subf %3, %13 : vector<8x128xf32>
    %89 = arith.mulf %88, %88 : vector<8x128xf32>
    %90 = arith.addf %87, %89 : vector<8x128xf32>
    %c0_35 = arith.constant 0 : index
    %c0_36 = arith.constant 0 : index
    %91 = vector.load %arg3[%c0_35, %c0_36] : memref<8x128xf32, #tpu.memory_space<vmem>>, vector<8x128xf32>
    %cst_37 = arith.constant 1.000000e+00 : f32
    %92 = vector.broadcast %cst_37 : f32 to vector<8x128xf32>
    %93 = arith.subf %92, %68 : vector<8x128xf32>
    %cst_38 = arith.constant 1.000000e-10 : f32
    %94 = vector.broadcast %cst_38 : f32 to vector<8x128xf32>
    %95 = arith.addf %90, %94 : vector<8x128xf32>
    %cst_39 = arith.constant 1.000000e-10 : f32
    %96 = vector.broadcast %cst_39 : f32 to vector<8x128xf32>
    %97 = arith.addf %85, %96 : vector<8x128xf32>
    %98 = arith.divf %95, %97 : vector<8x128xf32>
    %99 = arith.addf %93, %98 : vector<8x128xf32>
    %100 = arith.mulf %91, %99 : vector<8x128xf32>
    %cst_40 = arith.constant 1.000000e+00 : f32
    %101 = vector.broadcast %cst_40 : f32 to vector<8x128xf32>
    %102 = arith.mulf %101, %100 : vector<8x128xf32>
    %c0_41 = arith.constant 0 : index
    %c0_42 = arith.constant 0 : index
    %103 = vector.load %arg4[%c0_41, %c0_42] : memref<8x128xf32, #tpu.memory_space<vmem>>, vector<8x128xf32>
    tpu.vector_store %arg4[%c0_41, %c0_42], %102 {strides = array<i32>} : memref<8x128xf32, #tpu.memory_space<vmem>>, vector<8x128xf32>,
    return
  }
  func.func @transform_0(%arg0: i32) -> (i32, i32, i32) {
    %c0_i32 = arith.constant 0 : i32
    %c0_i32_0 = arith.constant 0 : i32
    %c0_i32_1 = arith.constant 0 : i32
    return %c0_i32, %arg0, %c0_i32_0 : i32, i32, i32
  }
  func.func @transform_1(%arg0: i32) -> (i32, i32, i32) {
    %c0_i32 = arith.constant 0 : i32
    %c0_i32_0 = arith.constant 0 : i32
    %c0_i32_1 = arith.constant 0 : i32
    return %c0_i32, %arg0, %c0_i32_0 : i32, i32, i32
  }
  func.func @transform_2(%arg0: i32) -> (i32, i32) {
    %c0_i32 = arith.constant 0 : i32
    %c0_i32_0 = arith.constant 0 : i32
    return %arg0, %c0_i32 : i32, i32
  }
  func.func @transform_3(%arg0: i32) -> (i32, i32) {
    %c0_i32 = arith.constant 0 : i32
    %c0_i32_0 = arith.constant 0 : i32
    return %arg0, %c0_i32 : i32, i32
  }
}

</mosaic_0001>

<llo_original>
// kernel: diou_loss.1
$region0: #{diou_loss.1}
  #allocation0 [shape = 'u32[]', space=smem, size = 0x4, offset = 0x4, fixed_abs, tag = 'smem constant byte address 0x4 - core index']
  #allocation1 [shape = 'u32[144,128]{1,0:T(1,128)}', space=vmem, size = 0x12000, scoped, tag = 'internal scratch']
  %s0 = inlined_call_operand.vmem [shape: f32[5,8,128], index: 0, kind: input, shape index: {}]
  %s1 = inlined_call_operand.vmem [shape: f32[5,8,128], index: 1, kind: input, shape index: {}]
  %s2 = inlined_call_operand.vmem [shape: f32[8,128], index: 2, kind: input, shape index: {}]
  %s3 = inlined_call_operand.vmem [shape: f32[8,128], index: 3, kind: output, shape index: {}]
  %s4 = sld [smem:[#allocation0]]
  $region22: #{diou_loss.1} parent=0
    _
  %s6 = ssub.s32 1, %s4
  %s7 = scalar_select 0, %s6, %s4
  // Predicated region
  $region2: #{diou_loss.1} parent=0 // pred_check
    _
  $region3: #{diou_loss.1} parent=0 // pred_check_branch
    %9 = sbr.rel (0) target = $region5
  $region4: #{diou_loss.1} parent=0 // pred_region
    _
  $region5: #{diou_loss.1} parent=0 // pred_fallthru
    _
  // Predicated region
  $region6: #{diou_loss.1} parent=0 // pred_check
    _
  $region7: #{diou_loss.1} parent=0 // pred_check_branch
    %11 = sbr.rel (0) target = $region9
  $region8: #{diou_loss.1} parent=0 // pred_region
    _
  $region9: #{diou_loss.1} parent=0 // pred_fallthru
    _
  // Predicated region
  $region10: #{diou_loss.1} parent=0 // pred_check
    _
  $region11: #{diou_loss.1} parent=0 // pred_check_branch
    %13 = sbr.rel (0) target = $region13
  $region12: #{diou_loss.1} parent=0 // pred_region
    _
  $region13: #{diou_loss.1} parent=0 // pred_fallthru
    _
  %v14 = vld [vmem:[%s0] sm:$0xff]
  %s15 = scalar_lea.vmem %s0, 8
  %v16 = vld [vmem:[%s15] sm:$0xff]
  %s17 = scalar_lea.vmem %s0, 16
  %v18 = vld [vmem:[%s17] sm:$0xff]
  %s19 = scalar_lea.vmem %s0, 24
  %v20 = vld [vmem:[%s19] sm:$0xff]
  %s21 = scalar_lea.vmem %s0, 32
  %v22 = vld [vmem:[%s21] sm:$0xff]
  %v23 = vld [vmem:[%s1] sm:$0xff]
  %s24 = scalar_lea.vmem %s1, 8
  %v25 = vld [vmem:[%s24] sm:$0xff]
  %s26 = scalar_lea.vmem %s1, 16
  %v27 = vld [vmem:[%s26] sm:$0xff]
  %s28 = scalar_lea.vmem %s1, 24
  %v29 = vld [vmem:[%s28] sm:$0xff]
  %s30 = scalar_lea.vmem %s1, 32
  %v31 = vld [vmem:[%s30] sm:$0xff]
  %v32 = vmul.f32 %v18, 0.5
  %v33 = vsub.f32 %v14, %v32
  %v34 = vmul.f32 %v20, 0.5
  %v35 = vsub.f32 %v16, %v34
  %v36 = vadd.f32 %v14, %v32
  %v37 = vadd.f32 %v16, %v34
  %v38 = vmul.f32 %v27, 0.5
  %v39 = vsub.f32 %v23, %v38
  %v40 = vmul.f32 %v29, 0.5
  %v41 = vsub.f32 %v25, %v40
  %v42 = vadd.f32 %v23, %v38
  %v43 = vadd.f32 %v25, %v40
  %v44 = vmin.f32 %v36, %v42
  %v45 = vmax.f32 %v33, %v39
  %v46 = vsub.f32 %v44, %v45
  %v47 = vmax.f32 %v46, 0.0
  %v48 = vmin.f32 %v37, %v43
  %v49 = vmax.f32 %v35, %v41
  %v50 = vsub.f32 %v48, %v49
  %v51 = vmax.f32 %v50, 0.0
  %v52 = vmul.f32 %v47, %v51
  %v53 = vsub.f32 %v36, %v33
  %v54 = vsub.f32 %v37, %v35
  %v55 = vmul.f32 %v53, %v54
  %v56 = vsub.f32 %v42, %v39
  %v57 = vsub.f32 %v43, %v41
  %v58 = vmul.f32 %v56, %v57
  %v59 = vadd.f32 %v55, %v58
  %v60 = vsub.f32 %v59, %v52
  %v61 = vmax.f32 %v60, 1e-06
  %v62 = vrcp.pop %v61
  %v63 = vmul.f32 %v52, %v62
  %v64 = vsub.f32 %v22, %v31
  %v65 = vand.u32 2147483647, %v64
  %vm66 = vcmp.le.f32.partialorder %v65, 0.7853982
  %vm67 = vcmp.lt.s32.totalorder %v64, 0
  %v68 = vand.u32 %v64, 2139095040
  %v69 = vshrl.u32 %v68, 23
  %v70 = vsub.s32 %v69, 127
  %v71 = vand.u32 2147483647, %v64
  %v72 = vand.u32 %v71, 8388607
  %v73 = vor.u32 %v72, 8388608
  %v74 = vsub.s32 0, %v73
  %v75 = vadd.s32 %v70, 1
  %vm76 = vcmp.gt.s32.totalorder %v75, 0
  %v77 = vsel %vm76, %v75, 0
  %v78 = vshrl.u32 %v77, 5
  %v79 = vand.u32 %v77, 31
  %v80 = vsub.s32 32, %v79
  %v81 = vshrl.u32 683565275, %v80
  %v82 = vshll.u32 683565275, %v79
  %v83 = vshrl.u32 2475754826, %v80
  %v84 = vor.u32 %v82, %v83
  %v85 = vshll.u32 2475754826, %v79
  %v86 = vshrl.u32 2131351028, %v80
  %v87 = vor.u32 %v85, %v86
  %v88 = vshll.u32 2131351028, %v79
  %v89 = vshrl.u32 2102212464, %v80
  %v90 = vor.u32 %v88, %v89
  %v91 = vshll.u32 2102212464, %v79
  %v92 = vshrl.u32 920167782, %v80
  %v93 = vor.u32 %v91, %v92
  %v94 = vshll.u32 920167782, %v79
  %v95 = vshrl.u32 1326507024, %v80
  %v96 = vor.u32 %v94, %v95
  %vm97 = vcmp.lt.s32.totalorder %v78, 1
  %vm98 = vcmp.lt.s32.totalorder %v78, 2
  %vm99 = vcmp.lt.s32.totalorder %v78, 3
  %vm100 = vcmp.lt.s32.totalorder %v78, 4
  %v101 = vsel %vm97, %v81, %v84
  %v102 = vsel %vm100, %v90, 2102212464
  %v103 = vsel %vm99, %v87, %v102
  %v104 = vsel %vm98, %v101, %v103
  %v105 = vsel %vm97, %v84, %v87
  %v106 = vsel %vm100, %v93, 920167782
  %v107 = vsel %vm99, %v90, %v106
  %v108 = vsel %vm98, %v105, %v107
  %v109 = vsel %vm97, %v87, %v90
  %v110 = vsel %vm100, %v96, 1326507024
  %v111 = vsel %vm99, %v93, %v110
  %v112 = vsel %vm98, %v109, %v111
  %v113 = vshll.u32 %v73, 8
  %v114 = vmul.u32.u64.compose %v113, %v112
  %v115 = vextract.low.u32 %v114
  %v116 = vextract.high.u32 %v114
  %v117 = vmul.u32.u64.compose %v113, %v108
  %v118 = vextract.low.u32 %v117
  %v119 = vextract.high.u32 %v117
  %v120 = vmul.u32 %v113, %v104
  %v121 = vadd.s32 %v116, %v118
  %vm122 = vc.u32 %v116, %v118
  %v123 = vadd.s32 %v119, 1
  %v124 = vsel %vm122, %v123, %v119
  %v125 = vadd.s32 %v120, %v124
  %v126 = vadd.s32 %v125, 536870912
  %v127 = vshrl.u32 %v126, 30
  %v128 = vshll.u32 %v127, 30
  %v129 = vsub.s32 %v125, %v128
  %vm130 = vcmp.lt.s32.totalorder %v129, 0
  %v131 = vsub.s32 0, %v129
  %v132 = vsel %vm130, %v131, %v129
  %v133 = vclz %v132
  %v134 = vsub.s32 %v133, 2
  %vm135 = vcmp.gt.s32.totalorder 0, %v134
  %v136 = vsel %vm135, 0, %v134
  %v137 = vsub.s32 32, %v136
  %v138 = vshll.u32 %v129, %v136
  %v139 = vshrl.u32 %v121, %v137
  %v140 = vor.u32 %v138, %v139
  %v141 = vsub.s32 4294967266, %v136
  %v142 = vadd.s32 %v141, 127
  %v143 = vshll.u32 %v142, 23
  %v144 = vor.u32 4788187, %v143
  %v145 = vand.u32 2147483647, %v144
  %v147 = vcvt.s32.f32 %v140
  %v148 = vmul.f32 %v147, %v145
  %v149 = vxor.u32 %v148, 2147483648
  %v150 = vsel %vm67, %v149, %v148
  %v151 = vsub.s32 4, %v127
  %v152 = vsel %vm67, %v151, %v127
  %v153 = vsel %vm66, %v64, %v150
  %v154 = vsel %vm66, 0, %v152
  %v155 = vcosq.f32.pop %v153
  %v156 = vsinq.f32.pop %v153
  %vm157 = vweird.f32 %v64
  %v158 = vand.u32 %v154, 3
  %vm159 = vcmp.lt.s32.totalorder %v158, 2
  %vm160 = vcmp.eq.s32.totalorder %v158, 0
  %v161 = vxor.u32 %v156, 2147483648
  %v162 = vsel %vm160, %v155, %v161
  %vm163 = vcmp.eq.s32.totalorder %v158, 2
  %v164 = vxor.u32 %v155, 2147483648
  %v165 = vsel %vm163, %v164, %v156
  %v166 = vsel %vm159, %v162, %v165
  %v167 = vsel %vm157, nan, %v166
  %v168 = vmul.f32 %v63, %v167
  %v169 = vmin.f32 %v33, %v36
  %v170 = vmin.f32 %v39, %v42
  %v171 = vmin.f32 %v169, %v170
  %v172 = vmax.f32 %v33, %v36
  %v173 = vmax.f32 %v39, %v42
  %v174 = vmax.f32 %v172, %v173
  %v175 = vmin.f32 %v35, %v37
  %v176 = vmin.f32 %v41, %v43
  %v177 = vmin.f32 %v175, %v176
  %v178 = vmax.f32 %v35, %v37
  %v179 = vmax.f32 %v41, %v43
  %v180 = vmax.f32 %v178, %v179
  %v181 = vsub.f32 %v174, %v171
  %v182 = vmul.f32 %v181, %v181
  %v183 = vsub.f32 %v180, %v177
  %v184 = vmul.f32 %v183, %v183
  %v185 = vadd.f32 %v182, %v184
  %v186 = vsub.f32 %v14, %v23
  %v187 = vmul.f32 %v186, %v186
  %v188 = vsub.f32 %v16, %v25
  %v189 = vmul.f32 %v188, %v188
  %v190 = vadd.f32 %v187, %v189
  %v191 = vld [vmem:[%s2] sm:$0xff]
  %v192 = vsub.f32 1.0, %v168
  %v193 = vadd.f32 %v190, 1e-10
  %v194 = vadd.f32 %v185, 1e-10
  %v195 = vrcp.pop %v194
  %v196 = vmul.f32 %v193, %v195
  %v197 = vadd.f32 %v192, %v196
  %v198 = vmul.f32 %v191, %v197
  %199 = vst [vmem:[%s3] sm:$0xff] %v198
  // Predicated region
  $region14: #{diou_loss.1} parent=0 // pred_check
    _
  $region15: #{diou_loss.1} parent=0 // pred_check_branch
    %201 = sbr.rel (0) target = $region17
  $region16: #{diou_loss.1} parent=0 // pred_region
    _
  $region17: #{diou_loss.1} parent=0 // pred_fallthru
    _
  // Predicated region
  $region18: #{diou_loss.1} parent=0 // pred_check
    _
  $region19: #{diou_loss.1} parent=0 // pred_check_branch
    %203 = sbr.rel (0) target = $region21
  $region20: #{diou_loss.1} parent=0 // pred_region
    _
  $region21: #{diou_loss.1} parent=0 // pred_fallthru
    _

</llo_original>
